<compile_context>
chip_gen: v7x
topology: tpu7x:2x2x1
jax: 0.10.0
libtpu: 0.0.40
codegen_flags: <defaults>
</compile_context>

<pallas_src>
import jax
import jax.numpy as jnp
from jax.experimental import pallas as pl
from jax.experimental.pallas import tpu as pltpu

HIDDEN = 32        # hidden_size
VOCAB = 64         # output_size (number of words)
MAX_LENGTH = 20    # max_length
N_LAYERS = 1       # n_layers (static; unrolled in-kernel)
LANES = 128        # lane width of weight blocks / padded outputs
ENC_PAD = 128      # encoder_outputs padded rows (== LANES so attn_w @ enc needs no slicing)

# ---- weight slab (bf16, (224, 128)): seven 32-row x 128-lane blocks ----------
R_ATTN_E = 0 * HIDDEN   # attn weight, embedded half    (H, L) in lanes [:L]
R_ATTN_H = 1 * HIDDEN   # attn weight, hidden half      (H, L)
R_COMB_E = 2 * HIDDEN   # combine weight, embedded half (H, H) in lanes [:H]
R_COMB_C = 3 * HIDDEN   # combine weight, context half  (H, H)
R_W_I    = 4 * HIDDEN   # fused GRU input weights       (H, 3H) in lanes [:3H]
R_W_H    = 5 * HIDDEN   # fused GRU hidden weights      (H, 3H)
R_OUT_W  = 6 * HIDDEN   # output projection             (H, V) in lanes [:V]
WSLAB_ROWS = 7 * HIDDEN  # 224 rows (multiple of the bf16 (16,128) tile)

# ---- bias slab (f32, (8, 128)): one bias per sublane row ----------------------
B_ATTN, B_COMB, B_I, B_H, B_OUT = 0, 1, 2, 3, 4
BSLAB_ROWS = 8


def attn_decoder_kernel(tok_ref, emb_ref, hid0_ref, enc_ref, w_ref, b_ref,
                        logp_ref, hid_out_ref, attn_ref, hid_sc):
    """One teacher-forced decode step per grid iteration; hidden carried in scratch."""
    f32, bf16 = jnp.float32, jnp.bfloat16
    H, L, V = HIDDEN, MAX_LENGTH, VOCAB
    step = pl.program_id(0)

    @pl.when(step == 0)
    def _():
        hid_sc[...] = hid0_ref[...]

    lane = jax.lax.broadcasted_iota(jnp.int32, (1, LANES), 1)

    # --- embedding lookup: one-hot matmul against the resident table (exact) ---
    tok = tok_ref[step]
    vlane = jax.lax.broadcasted_iota(jnp.int32, (1, V), 1)
    onehot = (vlane == tok).astype(f32)
    emb = jnp.dot(onehot, emb_ref[...], preferred_element_type=f32)       # (1, H)
    emb_bf = emb.astype(bf16)   # exact: table values are bf16-representable

    hid = hid_sc[...]                                                      # (1, H) f32
    hid_bf = hid.astype(bf16)

    # --- attention: split-weight linear, full-128-lane matmuls, masked softmax -
    attn_logits = (
        jnp.dot(emb_bf, w_ref[R_ATTN_E:R_ATTN_E + H, :], preferred_element_type=f32)
        + jnp.dot(hid_bf, w_ref[R_ATTN_H:R_ATTN_H + H, :], preferred_element_type=f32)
        + b_ref[B_ATTN:B_ATTN + 1, :])                                     # (1, 128)
    attn_logits = jnp.where(lane < L, attn_logits, -jnp.inf)
    m = jnp.max(attn_logits, axis=-1, keepdims=True)
    e = jnp.exp(attn_logits - m)                                           # 0 in padded lanes
    attn_w = e * pl.reciprocal(jnp.sum(e, axis=-1, keepdims=True), approx=True)

    # --- context: attn_w @ encoder_outputs (rows >= L are zero padding) --------
    ctx = jnp.dot(attn_w, enc_ref[...], preferred_element_type=f32)        # (1, H)

    # --- attn_combine -----------------------------------------------------------
    comb = (
        jnp.dot(emb_bf, w_ref[R_COMB_E:R_COMB_E + H, :], preferred_element_type=f32)
        + jnp.dot(ctx.astype(bf16), w_ref[R_COMB_C:R_COMB_C + H, :],
                  preferred_element_type=f32)
        + b_ref[B_COMB:B_COMB + 1, :])                                     # (1, 128)
    output = comb[:, :H]                                                   # (1, H)

    # --- n_layers x (relu -> GRU cell).  NOTE: like the tutorial module, the same
    #     single GRU cell and the same hidden state are reused for every "layer".
    for _ in range(N_LAYERS):
        x = jnp.maximum(output, 0.0).astype(bf16)
        hid_in_bf = hid.astype(bf16)
        gi = (jnp.dot(x, w_ref[R_W_I:R_W_I + H, :], preferred_element_type=f32)
              + b_ref[B_I:B_I + 1, :])                                     # (1,128): [r|z|n]
        gh = (jnp.dot(hid_in_bf, w_ref[R_W_H:R_W_H + H, :], preferred_element_type=f32)
              + b_ref[B_H:B_H + 1, :])
        r = jax.nn.sigmoid(gi[:, 0:H] + gh[:, 0:H])
        z = jax.nn.sigmoid(gi[:, H:2 * H] + gh[:, H:2 * H])
        n = jnp.tanh(gi[:, 2 * H:3 * H] + r * gh[:, 2 * H:3 * H])
        hid = (1.0 - z) * n + z * hid
        output = hid

    # --- output projection + masked log_softmax --------------------------------
    logits = (jnp.dot(output.astype(bf16), w_ref[R_OUT_W:R_OUT_W + H, :],
                      preferred_element_type=f32)
              + b_ref[B_OUT:B_OUT + 1, :])                                 # (1, 128)
    logits_m = jnp.where(lane < V, logits, -jnp.inf)
    m2 = jnp.max(logits_m, axis=-1, keepdims=True)
    lse = jnp.log(jnp.sum(jnp.exp(logits_m - m2), axis=-1, keepdims=True)) + m2
    logp = jnp.where(lane < V, logits - lse, 0.0)

    # --- per-step writebacks + carry hidden state -------------------------------
    hid_sc[...] = hid
    logp_ref[...] = logp
    hid_out_ref[...] = hid
    attn_ref[...] = attn_w


# ------------------------------ parameter handling ------------------------------

def make_raw_params(key):
    ks = iter(jax.random.split(key, 20))

    def w(shape, scale=0.1):
        return scale * jax.random.normal(next(ks), shape, dtype=jnp.float32)

    H, V, L = HIDDEN, VOCAB, MAX_LENGTH
    return {
        "embedding": w((V, H)),
        # nn.Linear / nn.GRU weights stored pre-transposed: (in_features, out_features)
        "attn_w": w((2 * H, L)), "attn_b": w((1, L)),
        "comb_w": w((2 * H, H)), "comb_b": w((1, H)),
        "w_ir": w((H, H)), "w_iz": w((H, H)), "w_in": w((H, H)),
        "b_ir": w((1, H)), "b_iz": w((1, H)), "b_in": w((1, H)),
        "w_hr": w((H, H)), "w_hz": w((H, H)), "w_hn": w((H, H)),
        "b_hr": w((1, H)), "b_hz": w((1, H)), "b_hn": w((1, H)),
        "out_w": w((H, V)), "out_b": w((1, V)),
    }


def bf16_round(x):
    return x.astype(jnp.bfloat16).astype(jnp.float32)


def quantize_like_kernel(raw):
    """bf16-round exactly the matrices that the packed kernel stores in bf16."""
    q = dict(raw)
    for k in ("embedding", "attn_w", "comb_w", "w_ir", "w_iz", "w_in",
              "w_hr", "w_hz", "w_hn", "out_w"):
        q[k] = bf16_round(raw[k])
    return q


def pack_params(raw):
    """Returns (embedding f32 [bf16-exact values], weight slab bf16, bias slab f32)."""
    H = HIDDEN

    def put(s, row, mat):
        r, c = mat.shape
        return s.at[row:row + r, :c].set(mat)

    w = jnp.zeros((WSLAB_ROWS, LANES), jnp.float32)
    w = put(w, R_ATTN_E, raw["attn_w"][:H])
    w = put(w, R_ATTN_H, raw["attn_w"][H:])
    w = put(w, R_COMB_E, raw["comb_w"][:H])
    w = put(w, R_COMB_C, raw["comb_w"][H:])
    w = put(w, R_W_I, jnp.concatenate([raw["w_ir"], raw["w_iz"], raw["w_in"]], axis=1))
    w = put(w, R_W_H, jnp.concatenate([raw["w_hr"], raw["w_hz"], raw["w_hn"]], axis=1))
    w = put(w, R_OUT_W, raw["out_w"])
    wslab = w.astype(jnp.bfloat16)

    b = jnp.zeros((BSLAB_ROWS, LANES), jnp.float32)
    b = put(b, B_ATTN, raw["attn_b"])
    b = put(b, B_COMB, raw["comb_b"])
    b = put(b, B_I, jnp.concatenate([raw["b_ir"], raw["b_iz"], raw["b_in"]], axis=1))
    b = put(b, B_H, jnp.concatenate([raw["b_hr"], raw["b_hz"], raw["b_hn"]], axis=1))
    b = put(b, B_OUT, raw["out_b"])

    emb = bf16_round(raw["embedding"])   # stored f32; in-kernel bf16 cast is exact
    return emb, wslab, b


# ---------------------------------- forward ----------------------------------

@jax.jit
def _decode_call(emb_table, wslab, bslab, tokens, hidden, encoder_outputs):
    T = tokens.shape[0]
    hid0 = hidden.reshape(1, HIDDEN).astype(jnp.float32)
    enc_pad = jnp.zeros((ENC_PAD, HIDDEN), jnp.float32).at[:MAX_LENGTH, :].set(
        encoder_outputs)

    grid_spec = pltpu.PrefetchScalarGridSpec(
        num_scalar_prefetch=1,          # tokens -> SMEM
        grid=(T,),
        in_specs=[
            # all inputs stay resident in VMEM for the whole decode (constant maps)
            pl.BlockSpec((VOCAB, HIDDEN), lambda i, tok: (0, 0)),       # embedding table
            pl.BlockSpec((1, HIDDEN), lambda i, tok: (0, 0)),           # initial hidden
            pl.BlockSpec((ENC_PAD, HIDDEN), lambda i, tok: (0, 0)),     # encoder outputs
            pl.BlockSpec((WSLAB_ROWS, LANES), lambda i, tok: (0, 0)),   # bf16 weights
            pl.BlockSpec((BSLAB_ROWS, LANES), lambda i, tok: (0, 0)),   # f32 biases
        ],
        out_specs=[
            pl.BlockSpec((1, LANES), lambda i, tok: (i, 0)),            # log_probs (padded)
            pl.BlockSpec((1, HIDDEN), lambda i, tok: (i, 0)),           # hidden per step
            pl.BlockSpec((1, LANES), lambda i, tok: (i, 0)),            # attn weights (padded)
        ],
        scratch_shapes=[pltpu.VMEM((1, HIDDEN), jnp.float32)],          # carried hidden
    )
    logp_pad, hids, attn_pad = pl.pallas_call(
        attn_decoder_kernel,
        grid_spec=grid_spec,
        out_shape=(
            jax.ShapeDtypeStruct((T, LANES), jnp.float32),
            jax.ShapeDtypeStruct((T, HIDDEN), jnp.float32),
            jax.ShapeDtypeStruct((T, LANES), jnp.float32),
        ),
        compiler_params=pltpu.CompilerParams(
            dimension_semantics=("arbitrary",)),   # steps are sequentially dependent
    )(tokens, emb_table, hid0, enc_pad, wslab, bslab)
    return logp_pad[:, :VOCAB], hids, attn_pad[:, :MAX_LENGTH]


def attn_decoder_decode(params, tokens, hidden, encoder_outputs):
    """Teacher-forced multi-step decode: all T steps in one kernel launch."""
    emb_table, wslab, bslab = params
    tokens = jnp.asarray(tokens, jnp.int32).reshape(-1)
    return _decode_call(emb_table, wslab, bslab, tokens, hidden, encoder_outputs)


def attn_decoder_forward(params, token, hidden, encoder_outputs):
    """Single decoder step == AttnDecoderRNN.forward (eval mode)."""
    logp, hids, attn = attn_decoder_decode(
        params, jnp.reshape(token, (1,)), hidden, encoder_outputs)
    return logp, hids.reshape(1, 1, HIDDEN), attn


# ---------------------------- pure-JAX reference ------------------------------

def reference_step(p, token, hid, encoder_outputs):
    H = HIDDEN
    emb = p["embedding"][token].reshape(1, H)
    attn_w = jax.nn.softmax(
        jnp.concatenate([emb, hid], axis=1) @ p["attn_w"] + p["attn_b"], axis=-1)
    ctx = attn_w @ encoder_outputs
    output = jnp.concatenate([emb, ctx], axis=1) @ p["comb_w"] + p["comb_b"]
    for _ in range(N_LAYERS):
        x = jnp.maximum(output, 0.0)
        r = jax.nn.sigmoid(x @ p["w_ir"] + p["b_ir"] + hid @ p["w_hr"] + p["b_hr"])
        z = jax.nn.sigmoid(x @ p["w_iz"] + p["b_iz"] + hid @ p["w_hz"] + p["b_hz"])
        n = jnp.tanh(x @ p["w_in"] + p["b_in"] + r * (hid @ p["w_hn"] + p["b_hn"]))
        hid = (1.0 - z) * n + z * hid
        output = hid
    logp = jax.nn.log_softmax(output @ p["out_w"] + p["out_b"], axis=-1)
    return logp, hid, attn_w


if __name__ == "__main__":
    key = jax.random.PRNGKey(0)
    pkey, ekey = jax.random.split(key)
    raw = make_raw_params(pkey)
    params = pack_params(raw)
    raw_q = quantize_like_kernel(raw)   # reference uses the same bf16-rounded weights

    encoder_outputs = jax.random.normal(ekey, (MAX_LENGTH, HIDDEN), dtype=jnp.float32)
    hidden0 = jnp.zeros((1, 1, HIDDEN), dtype=jnp.float32)       # initHidden()
    tokens = jnp.array([3, 17, 42, 7], dtype=jnp.int32)          # teacher-forced steps

    # Single decoder step (== AttnDecoderRNN.forward).
    token0 = jnp.array([[3]], dtype=jnp.int32)
    logp1, h1, attn1 = attn_decoder_forward(params, token0, hidden0, encoder_outputs)
    jax.block_until_ready((logp1, h1, attn1))
    assert logp1.shape == (1, VOCAB)
    assert h1.shape == (1, 1, HIDDEN)
    assert attn1.shape == (1, MAX_LENGTH)

    # Multi-step decode: weights resident, hidden carried in VMEM scratch.
    logp, hids, attn = attn_decoder_decode(params, tokens, hidden0, encoder_outputs)
    jax.block_until_ready((logp, hids, attn))

    # Pure-JAX reference (f32 math over the same bf16-rounded weights).
    hid = hidden0.reshape(1, HIDDEN)
    ref_logp, ref_hid, ref_attn = [], [], []
    for t in list(tokens):
        l, hid, a = reference_step(raw_q, int(t), hid, encoder_outputs)
        ref_logp.append(l)
        ref_hid.append(hid)
        ref_attn.append(a)
    ref_logp = jnp.concatenate(ref_logp, axis=0)
    ref_hid = jnp.concatenate(ref_hid, axis=0)
    ref_attn = jnp.concatenate(ref_attn, axis=0)

    assert jnp.allclose(logp, ref_logp, atol=1e-2, rtol=1e-2)
    assert jnp.allclose(hids, ref_hid, atol=1e-2, rtol=1e-2)
    assert jnp.allclose(attn, ref_attn, atol=1e-2, rtol=1e-2)
    assert jnp.allclose(logp1, ref_logp[:1], atol=1e-2, rtol=1e-2)
    assert jnp.allclose(attn1, ref_attn[:1], atol=1e-2, rtol=1e-2)

    print("KERNEL_OK")
</pallas_src>

<mosaic_0001>
module attributes {stable_mosaic.version = 11 : i64} {
  func.func @attn_decoder_kernel(%arg0: i32, %arg1: memref<1xi32, #tpu.memory_space<smem>>, %arg2: memref<64x32xf32, #tpu.memory_space<vmem>>, %arg3: memref<1x32xf32, #tpu.memory_space<vmem>>, %arg4: memref<128x32xf32, #tpu.memory_space<vmem>>, %arg5: memref<224x128xbf16, #tpu.memory_space<vmem>>, %arg6: memref<8x128xf32, #tpu.memory_space<vmem>>, %arg7: memref<1x128xf32, #tpu.memory_space<vmem>>, %arg8: memref<1x32xf32, #tpu.memory_space<vmem>>, %arg9: memref<1x128xf32, #tpu.memory_space<vmem>>, %arg10: memref<1x32xf32, #tpu.memory_space<vmem>>) attributes {dimension_semantics = [#tpu.dimension_semantics<arbitrary>], iteration_bounds = array<i64: 1>, scalar_prefetch = 1 : i64, scratch_operands = 1 : i64, tpu.core_type = #tpu.core_type<tc>, window_params = [{pipeline_mode = #tpu.pipeline_mode<synchronous>, transform_indices = @transform_0, window_bounds = array<i64: 64, 32>}, {pipeline_mode = #tpu.pipeline_mode<synchronous>, transform_indices = @transform_1, window_bounds = array<i64: 1, 32>}, {pipeline_mode = #tpu.pipeline_mode<synchronous>, transform_indices = @transform_2, window_bounds = array<i64: 128, 32>}, {pipeline_mode = #tpu.pipeline_mode<synchronous>, transform_indices = @transform_3, window_bounds = array<i64: 224, 128>}, {pipeline_mode = #tpu.pipeline_mode<synchronous>, transform_indices = @transform_4, window_bounds = array<i64: 8, 128>}, {transform_indices = @transform_5, window_bounds = array<i64: 1, 128>}, {transform_indices = @transform_6, window_bounds = array<i64: 1, 32>}, {transform_indices = @transform_7, window_bounds = array<i64: 1, 128>}]} {
    %c0_i32 = arith.constant 0 : i32
    %0 = arith.cmpi eq, %arg0, %c0_i32 : i32
    %1 = arith.extui %0 : i1 to i32
    %c0_i32_0 = arith.constant 0 : i32
    %2 = arith.cmpi ne, %1, %c0_i32_0 : i32
    scf.if %2 {
      %c0_48 = arith.constant 0 : index
      %c0_49 = arith.constant 0 : index
      %114 = vector.load %arg3[%c0_48, %c0_49] : memref<1x32xf32, #tpu.memory_space<vmem>>, vector<1x32xf32>
      %c0_50 = arith.constant 0 : index
      %c0_51 = arith.constant 0 : index
      %115 = vector.load %arg10[%c0_50, %c0_51] : memref<1x32xf32, #tpu.memory_space<vmem>>, vector<1x32xf32>
      tpu.vector_store %arg10[%c0_50, %c0_51], %114 {strides = array<i32>} : memref<1x32xf32, #tpu.memory_space<vmem>>, vector<1x32xf32>,
    } else {
    }
    %3 = tpu.iota {dimensions = array<i32: 1>} : vector<1x128xi32>
    %4 = arith.index_cast %arg0 : i32 to index
    %5 = memref.load %arg1[%4] : memref<1xi32, #tpu.memory_space<smem>>
    %6 = tpu.iota {dimensions = array<i32: 1>} : vector<1x64xi32>
    %7 = vector.broadcast %5 : i32 to vector<1x64xi32>
    %8 = arith.cmpi eq, %6, %7 : vector<1x64xi32>
    %9 = arith.extui %8 : vector<1x64xi1> to vector<1x64xi32>
    %10 = arith.sitofp %9 : vector<1x64xi32> to vector<1x64xf32>
    %c0 = arith.constant 0 : index
    %c0_1 = arith.constant 0 : index
    %11 = vector.load %arg2[%c0, %c0_1] : memref<64x32xf32, #tpu.memory_space<vmem>>, vector<64x32xf32>
    %cst = arith.constant dense<0.000000e+00> : vector<1x32xf32>
    %12 = tpu.matmul %10, %11, %cst {dimension_numbers = #tpu.dot_dimension_numbers<[1], [0], [0], [1], [0, 0, 1, 1], [], []>} : vector<1x64xf32>, vector<64x32xf32>, vector<1x32xf32> -> vector<1x32xf32>
    %13 = arith.truncf %12 : vector<1x32xf32> to vector<1x32xbf16>
    %c0_2 = arith.constant 0 : index
    %c0_3 = arith.constant 0 : index
    %14 = vector.load %arg10[%c0_2, %c0_3] : memref<1x32xf32, #tpu.memory_space<vmem>>, vector<1x32xf32>
    %15 = arith.truncf %14 : vector<1x32xf32> to vector<1x32xbf16>
    %c0_4 = arith.constant 0 : index
    %c0_5 = arith.constant 0 : index
    %16 = vector.load %arg5[%c0_4, %c0_5] : memref<224x128xbf16, #tpu.memory_space<vmem>>, vector<32x128xbf16>
    %cst_6 = arith.constant dense<0.000000e+00> : vector<1x128xf32>
    %17 = tpu.matmul %13, %16, %cst_6 {dimension_numbers = #tpu.dot_dimension_numbers<[1], [0], [0], [1], [0, 0, 1, 1], [], []>} : vector<1x32xbf16>, vector<32x128xbf16>, vector<1x128xf32> -> vector<1x128xf32>
    %c32 = arith.constant 32 : index
    %c0_7 = arith.constant 0 : index
    %18 = vector.load %arg5[%c32, %c0_7] : memref<224x128xbf16, #tpu.memory_space<vmem>>, vector<32x128xbf16>
    %cst_8 = arith.constant dense<0.000000e+00> : vector<1x128xf32>
    %19 = tpu.matmul %15, %18, %cst_8 {dimension_numbers = #tpu.dot_dimension_numbers<[1], [0], [0], [1], [0, 0, 1, 1], [], []>} : vector<1x32xbf16>, vector<32x128xbf16>, vector<1x128xf32> -> vector<1x128xf32>
    %20 = arith.addf %17, %19 : vector<1x128xf32>
    %c0_9 = arith.constant 0 : index
    %c0_10 = arith.constant 0 : index
    %21 = vector.load %arg6[%c0_9, %c0_10] : memref<8x128xf32, #tpu.memory_space<vmem>>, vector<1x128xf32>
    %22 = arith.addf %20, %21 : vector<1x128xf32>
    %c20_i32 = arith.constant 20 : i32
    %23 = vector.broadcast %c20_i32 : i32 to vector<1x128xi32>
    %24 = arith.cmpi slt, %3, %23 : vector<1x128xi32>
    %cst_11 = arith.constant 0xFF800000 : f32
    %25 = vector.broadcast %cst_11 : f32 to vector<1x128xf32>
    %26 = arith.select %24, %22, %25 : vector<1x128xi1>, vector<1x128xf32>
    %cst_12 = arith.constant dense<0xFF800000> : vector<1xf32>
    %27 = vector.multi_reduction <maximumf>, %26, %cst_12 [1] : vector<1x128xf32> to vector<1xf32>
    %28 = vector.shape_cast %27 : vector<1xf32> to vector<1x1xf32>
    %29 = vector.broadcast %28 : vector<1x1xf32> to vector<1x128xf32>
    %30 = arith.subf %26, %29 : vector<1x128xf32>
    %31 = math.exp %30 : vector<1x128xf32>
    %cst_13 = arith.constant dense<0.000000e+00> : vector<1xf32>
    %32 = vector.multi_reduction <add>, %31, %cst_13 [1] : vector<1x128xf32> to vector<1xf32>
    %33 = vector.shape_cast %32 : vector<1xf32> to vector<1x1xf32>
    %34 = tpu.reciprocal %33 {approx = true} : vector<1x1xf32> -> vector<1x1xf32>
    %35 = vector.broadcast %34 : vector<1x1xf32> to vector<1x128xf32>
    %36 = arith.mulf %31, %35 : vector<1x128xf32>
    %c0_14 = arith.constant 0 : index
    %c0_15 = arith.constant 0 : index
    %37 = vector.load %arg4[%c0_14, %c0_15] : memref<128x32xf32, #tpu.memory_space<vmem>>, vector<128x32xf32>
    %cst_16 = arith.constant dense<0.000000e+00> : vector<1x32xf32>
    %38 = tpu.matmul %36, %37, %cst_16 {dimension_numbers = #tpu.dot_dimension_numbers<[1], [0], [0], [1], [0, 0, 1, 1], [], []>} : vector<1x128xf32>, vector<128x32xf32>, vector<1x32xf32> -> vector<1x32xf32>
    %c64 = arith.constant 64 : index
    %c0_17 = arith.constant 0 : index
    %39 = vector.load %arg5[%c64, %c0_17] : memref<224x128xbf16, #tpu.memory_space<vmem>>, vector<32x128xbf16>
    %cst_18 = arith.constant dense<0.000000e+00> : vector<1x128xf32>
    %40 = tpu.matmul %13, %39, %cst_18 {dimension_numbers = #tpu.dot_dimension_numbers<[1], [0], [0], [1], [0, 0, 1, 1], [], []>} : vector<1x32xbf16>, vector<32x128xbf16>, vector<1x128xf32> -> vector<1x128xf32>
    %41 = arith.truncf %38 : vector<1x32xf32> to vector<1x32xbf16>
    %c96 = arith.constant 96 : index
    %c0_19 = arith.constant 0 : index
    %42 = vector.load %arg5[%c96, %c0_19] : memref<224x128xbf16, #tpu.memory_space<vmem>>, vector<32x128xbf16>
    %cst_20 = arith.constant dense<0.000000e+00> : vector<1x128xf32>
    %43 = tpu.matmul %41, %42, %cst_20 {dimension_numbers = #tpu.dot_dimension_numbers<[1], [0], [0], [1], [0, 0, 1, 1], [], []>} : vector<1x32xbf16>, vector<32x128xbf16>, vector<1x128xf32> -> vector<1x128xf32>
    %44 = arith.addf %40, %43 : vector<1x128xf32>
    %c1 = arith.constant 1 : index
    %c0_21 = arith.constant 0 : index
    %45 = vector.load %arg6[%c1, %c0_21] : memref<8x128xf32, #tpu.memory_space<vmem>>, vector<1x128xf32>
    %46 = arith.addf %44, %45 : vector<1x128xf32>
    %47 = vector.extract_strided_slice %46 {offsets = [0, 0], sizes = [1, 32], strides = [1, 1]} : vector<1x128xf32> to vector<1x32xf32>
    %cst_22 = arith.constant 0.000000e+00 : f32
    %48 = vector.broadcast %cst_22 : f32 to vector<1x32xf32>
    %49 = arith.maximumf %47, %48 : vector<1x32xf32>
    %50 = arith.truncf %49 : vector<1x32xf32> to vector<1x32xbf16>
    %51 = arith.truncf %14 : vector<1x32xf32> to vector<1x32xbf16>
    %c128 = arith.constant 128 : index
    %c0_23 = arith.constant 0 : index
    %52 = vector.load %arg5[%c128, %c0_23] : memref<224x128xbf16, #tpu.memory_space<vmem>>, vector<32x128xbf16>
    %cst_24 = arith.constant dense<0.000000e+00> : vector<1x128xf32>
    %53 = tpu.matmul %50, %52, %cst_24 {dimension_numbers = #tpu.dot_dimension_numbers<[1], [0], [0], [1], [0, 0, 1, 1], [], []>} : vector<1x32xbf16>, vector<32x128xbf16>, vector<1x128xf32> -> vector<1x128xf32>
    %c2 = arith.constant 2 : index
    %c0_25 = arith.constant 0 : index
    %54 = vector.load %arg6[%c2, %c0_25] : memref<8x128xf32, #tpu.memory_space<vmem>>, vector<1x128xf32>
    %55 = arith.addf %53, %54 : vector<1x128xf32>
    %c160 = arith.constant 160 : index
    %c0_26 = arith.constant 0 : index
    %56 = vector.load %arg5[%c160, %c0_26] : memref<224x128xbf16, #tpu.memory_space<vmem>>, vector<32x128xbf16>
    %cst_27 = arith.constant dense<0.000000e+00> : vector<1x128xf32>
    %57 = tpu.matmul %51, %56, %cst_27 {dimension_numbers = #tpu.dot_dimension_numbers<[1], [0], [0], [1], [0, 0, 1, 1], [], []>} : vector<1x32xbf16>, vector<32x128xbf16>, vector<1x128xf32> -> vector<1x128xf32>
    %c3 = arith.constant 3 : index
    %c0_28 = arith.constant 0 : index
    %58 = vector.load %arg6[%c3, %c0_28] : memref<8x128xf32, #tpu.memory_space<vmem>>, vector<1x128xf32>
    %59 = arith.addf %57, %58 : vector<1x128xf32>
    %60 = vector.extract_strided_slice %55 {offsets = [0, 0], sizes = [1, 32], strides = [1, 1]} : vector<1x128xf32> to vector<1x32xf32>
    %61 = vector.extract_strided_slice %59 {offsets = [0, 0], sizes = [1, 32], strides = [1, 1]} : vector<1x128xf32> to vector<1x32xf32>
    %62 = arith.addf %60, %61 : vector<1x32xf32>
    %63 = arith.negf %62 : vector<1x32xf32>
    %64 = math.exp %63 : vector<1x32xf32>
    %cst_29 = arith.constant 1.000000e+00 : f32
    %65 = vector.broadcast %cst_29 : f32 to vector<1x32xf32>
    %66 = arith.addf %65, %64 : vector<1x32xf32>
    %67 = arith.divf %65, %66 : vector<1x32xf32>
    %68 = vector.extract_strided_slice %55 {offsets = [0, 32], sizes = [1, 32], strides = [1, 1]} : vector<1x128xf32> to vector<1x32xf32>
    %69 = vector.extract_strided_slice %59 {offsets = [0, 32], sizes = [1, 32], strides = [1, 1]} : vector<1x128xf32> to vector<1x32xf32>
    %70 = arith.addf %68, %69 : vector<1x32xf32>
    %71 = arith.negf %70 : vector<1x32xf32>
    %72 = math.exp %71 : vector<1x32xf32>
    %cst_30 = arith.constant 1.000000e+00 : f32
    %73 = vector.broadcast %cst_30 : f32 to vector<1x32xf32>
    %74 = arith.addf %73, %72 : vector<1x32xf32>
    %75 = arith.divf %73, %74 : vector<1x32xf32>
    %76 = vector.extract_strided_slice %55 {offsets = [0, 64], sizes = [1, 32], strides = [1, 1]} : vector<1x128xf32> to vector<1x32xf32>
    %77 = vector.extract_strided_slice %59 {offsets = [0, 64], sizes = [1, 32], strides = [1, 1]} : vector<1x128xf32> to vector<1x32xf32>
    %78 = arith.mulf %67, %77 : vector<1x32xf32>
    %79 = arith.addf %76, %78 : vector<1x32xf32>
    %80 = math.tanh %79 : vector<1x32xf32>
    %cst_31 = arith.constant 1.000000e+00 : f32
    %81 = vector.broadcast %cst_31 : f32 to vector<1x32xf32>
    %82 = arith.subf %81, %75 : vector<1x32xf32>
    %83 = arith.mulf %82, %80 : vector<1x32xf32>
    %84 = arith.mulf %75, %14 : vector<1x32xf32>
    %85 = arith.addf %83, %84 : vector<1x32xf32>
    %86 = arith.truncf %85 : vector<1x32xf32> to vector<1x32xbf16>
    %c192 = arith.constant 192 : index
    %c0_32 = arith.constant 0 : index
    %87 = vector.load %arg5[%c192, %c0_32] : memref<224x128xbf16, #tpu.memory_space<vmem>>, vector<32x128xbf16>
    %cst_33 = arith.constant dense<0.000000e+00> : vector<1x128xf32>
    %88 = tpu.matmul %86, %87, %cst_33 {dimension_numbers = #tpu.dot_dimension_numbers<[1], [0], [0], [1], [0, 0, 1, 1], [], []>} : vector<1x32xbf16>, vector<32x128xbf16>, vector<1x128xf32> -> vector<1x128xf32>
    %c4 = arith.constant 4 : index
    %c0_34 = arith.constant 0 : index
    %89 = vector.load %arg6[%c4, %c0_34] : memref<8x128xf32, #tpu.memory_space<vmem>>, vector<1x128xf32>
    %90 = arith.addf %88, %89 : vector<1x128xf32>
    %c64_i32 = arith.constant 64 : i32
    %91 = vector.broadcast %c64_i32 : i32 to vector<1x128xi32>
    %92 = arith.cmpi slt, %3, %91 : vector<1x128xi32>
    %cst_35 = arith.constant 0xFF800000 : f32
    %93 = vector.broadcast %cst_35 : f32 to vector<1x128xf32>
    %94 = arith.select %92, %90, %93 : vector<1x128xi1>, vector<1x128xf32>
    %cst_36 = arith.constant dense<0xFF800000> : vector<1xf32>
    %95 = vector.multi_reduction <maximumf>, %94, %cst_36 [1] : vector<1x128xf32> to vector<1xf32>
    %96 = vector.shape_cast %95 : vector<1xf32> to vector<1x1xf32>
    %97 = vector.broadcast %96 : vector<1x1xf32> to vector<1x128xf32>
    %98 = arith.subf %94, %97 : vector<1x128xf32>
    %99 = math.exp %98 : vector<1x128xf32>
    %cst_37 = arith.constant dense<0.000000e+00> : vector<1xf32>
    %100 = vector.multi_reduction <add>, %99, %cst_37 [1] : vector<1x128xf32> to vector<1xf32>
    %101 = vector.shape_cast %100 : vector<1xf32> to vector<1x1xf32>
    %102 = math.log %101 : vector<1x1xf32>
    %103 = arith.addf %102, %96 : vector<1x1xf32>
    %c64_i32_38 = arith.constant 64 : i32
    %104 = vector.broadcast %c64_i32_38 : i32 to vector<1x128xi32>
    %105 = arith.cmpi slt, %3, %104 : vector<1x128xi32>
    %106 = vector.broadcast %103 : vector<1x1xf32> to vector<1x128xf32>
    %107 = arith.subf %90, %106 : vector<1x128xf32>
    %cst_39 = arith.constant 0.000000e+00 : f32
    %108 = vector.broadcast %cst_39 : f32 to vector<1x128xf32>
    %109 = arith.select %105, %107, %108 : vector<1x128xi1>, vector<1x128xf32>
    %c0_40 = arith.constant 0 : index
    %c0_41 = arith.constant 0 : index
    %110 = vector.load %arg10[%c0_40, %c0_41] : memref<1x32xf32, #tpu.memory_space<vmem>>, vector<1x32xf32>
    tpu.vector_store %arg10[%c0_40, %c0_41], %85 {strides = array<i32>} : memref<1x32xf32, #tpu.memory_space<vmem>>, vector<1x32xf32>,
    %c0_42 = arith.constant 0 : index
    %c0_43 = arith.constant 0 : index
    %111 = vector.load %arg7[%c0_42, %c0_43] : memref<1x128xf32, #tpu.memory_space<vmem>>, vector<1x128xf32>
    tpu.vector_store %arg7[%c0_42, %c0_43], %109 {strides = array<i32>} : memref<1x128xf32, #tpu.memory_space<vmem>>, vector<1x128xf32>,
    %c0_44 = arith.constant 0 : index
    %c0_45 = arith.constant 0 : index
    %112 = vector.load %arg8[%c0_44, %c0_45] : memref<1x32xf32, #tpu.memory_space<vmem>>, vector<1x32xf32>
    tpu.vector_store %arg8[%c0_44, %c0_45], %85 {strides = array<i32>} : memref<1x32xf32, #tpu.memory_space<vmem>>, vector<1x32xf32>,
    %c0_46 = arith.constant 0 : index
    %c0_47 = arith.constant 0 : index
    %113 = vector.load %arg9[%c0_46, %c0_47] : memref<1x128xf32, #tpu.memory_space<vmem>>, vector<1x128xf32>
    tpu.vector_store %arg9[%c0_46, %c0_47], %36 {strides = array<i32>} : memref<1x128xf32, #tpu.memory_space<vmem>>, vector<1x128xf32>,
    return
  }
  func.func @transform_0(%arg0: i32, %arg1: memref<1xi32, #tpu.memory_space<smem>>) -> (i32, i32) {
    %c0_i32 = arith.constant 0 : i32
    %c0_i32_0 = arith.constant 0 : i32
    %c0_i32_1 = arith.constant 0 : i32
    return %c0_i32, %c0_i32_0 : i32, i32
  }
  func.func @transform_1(%arg0: i32, %arg1: memref<1xi32, #tpu.memory_space<smem>>) -> (i32, i32) {
    %c0_i32 = arith.constant 0 : i32
    %c0_i32_0 = arith.constant 0 : i32
    %c0_i32_1 = arith.constant 0 : i32
    return %c0_i32, %c0_i32_0 : i32, i32
  }
  func.func @transform_2(%arg0: i32, %arg1: memref<1xi32, #tpu.memory_space<smem>>) -> (i32, i32) {
    %c0_i32 = arith.constant 0 : i32
    %c0_i32_0 = arith.constant 0 : i32
    %c0_i32_1 = arith.constant 0 : i32
    return %c0_i32, %c0_i32_0 : i32, i32
  }
  func.func @transform_3(%arg0: i32, %arg1: memref<1xi32, #tpu.memory_space<smem>>) -> (i32, i32) {
    %c0_i32 = arith.constant 0 : i32
    %c0_i32_0 = arith.constant 0 : i32
    %c0_i32_1 = arith.constant 0 : i32
    return %c0_i32, %c0_i32_0 : i32, i32
  }
  func.func @transform_4(%arg0: i32, %arg1: memref<1xi32, #tpu.memory_space<smem>>) -> (i32, i32) {
    %c0_i32 = arith.constant 0 : i32
    %c0_i32_0 = arith.constant 0 : i32
    %c0_i32_1 = arith.constant 0 : i32
    return %c0_i32, %c0_i32_0 : i32, i32
  }
  func.func @transform_5(%arg0: i32, %arg1: memref<1xi32, #tpu.memory_space<smem>>) -> (i32, i32) {
    %c0_i32 = arith.constant 0 : i32
    %c0_i32_0 = arith.constant 0 : i32
    return %arg0, %c0_i32 : i32, i32
  }
  func.func @transform_6(%arg0: i32, %arg1: memref<1xi32, #tpu.memory_space<smem>>) -> (i32, i32) {
    %c0_i32 = arith.constant 0 : i32
    %c0_i32_0 = arith.constant 0 : i32
    return %arg0, %c0_i32 : i32, i32
  }
  func.func @transform_7(%arg0: i32, %arg1: memref<1xi32, #tpu.memory_space<smem>>) -> (i32, i32) {
    %c0_i32 = arith.constant 0 : i32
    %c0_i32_0 = arith.constant 0 : i32
    return %arg0, %c0_i32 : i32, i32
  }
}

</mosaic_0001>

<llo_original>
// kernel: _decode_call.1
$region0: #{_decode_call.1}
  #allocation0 [shape = 'u32[]', space=smem, size = 0x4, offset = 0x4, fixed_abs, tag = 'smem constant byte address 0x4 - core index']
  #allocation1 [shape = 'u32[144,128]{1,0:T(1,128)}', space=vmem, size = 0x12000, scoped, tag = 'internal scratch']
  #allocation2 [shape = 'f32[1,32]{1,0:T(1,128)}', space=vmem, size = 0x200, scoped, tag = 'scratch operand']
  #allocation3 [shape = 's32[1]{0}', space=sflag, size = 0x4, scoped, tag = 'scoped memory for _decode_call.1']
  #allocation4 [shape = 's32[1]{0:T(128)S(6)}', space=smem, size = 0x200, scoped, tag = 'prefetched SMEM operand 0']
  %s0 = inlined_call_operand.<no memory space> [shape: s32[1], index: 0, kind: input, shape index: {}]
  %s1 = inlined_call_operand.vmem [shape: f32[64,32], index: 1, kind: input, shape index: {}]
  %s2 = inlined_call_operand.vmem [shape: f32[1,32], index: 2, kind: input, shape index: {}]
  %s3 = inlined_call_operand.vmem [shape: f32[128,32], index: 3, kind: input, shape index: {}]
  %s4 = inlined_call_operand.vmem [shape: bf16[224,128], index: 4, kind: input, shape index: {}]
  %s5 = inlined_call_operand.vmem [shape: f32[8,128], index: 5, kind: input, shape index: {}]
  %s6 = inlined_call_operand.hbm [shape: f32[1,128], index: 6, kind: output, shape index: {0}]
  %s7 = inlined_call_operand.hbm [shape: f32[1,32], index: 7, kind: output, shape index: {1}]
  %s8 = inlined_call_operand.hbm [shape: f32[1,128], index: 8, kind: output, shape index: {2}]
  %9 = xla_tuple %s6, %s7, %s8
  %s10 = sld [smem:[#allocation0]]
  $region50: #{_decode_call.1} parent=0
    _
  %s12 = ssub.s32 1, %s10
  %s13 = scalar_select 0, %s12, %s10
  %14 = sst [smem:[#allocation4]] %s0
  $region1: #{_decode_call.1} parent=0
    #allocation5 [shape = 'u8[512]{0}', space=vmem, size = 0x400, scoped, tag = 'output window, operand 0, single buffered']
    #allocation6 [shape = 's32[1]{0}', space=sflag, size = 0x4, scoped, tag = 'scoped memory for _decode_call.1']
    #allocation7 [shape = 'u8[512]{0}', space=vmem, size = 0x400, scoped, tag = 'output window, operand 1, single buffered']
    #allocation8 [shape = 's32[1]{0}', space=sflag, size = 0x4, scoped, tag = 'scoped memory for _decode_call.1']
    #allocation9 [shape = 'u8[512]{0}', space=vmem, size = 0x400, scoped, tag = 'output window, operand 2, single buffered']
    %15 = vsyncpa [#allocation6], 0
    %16 = vsyncpa [#allocation8], 0
    // Predicated region
    $region2: #{_decode_call.1} parent=1 // pred_check
      _
    $region3: #{_decode_call.1} parent=1 // pred_check_branch
      %18 = sbr.rel (0) target = $region5
    $region4: #{_decode_call.1} parent=1 // pred_region
      _
    $region5: #{_decode_call.1} parent=1 // pred_fallthru
      _
    // Predicated region
    $region6: #{_decode_call.1} parent=1 // pred_check
      _
    $region7: #{_decode_call.1} parent=1 // pred_check_branch
      %20 = sbr.rel (0) target = $region9
    $region8: #{_decode_call.1} parent=1 // pred_region
      _
    $region9: #{_decode_call.1} parent=1 // pred_fallthru
      _
    // Predicated region
    $region10: #{_decode_call.1} parent=1 // pred_check
      _
    $region11: #{_decode_call.1} parent=1 // pred_check_branch
      %22 = sbr.rel (0) target = $region13
    $region12: #{_decode_call.1} parent=1 // pred_region
      _
    $region13: #{_decode_call.1} parent=1 // pred_fallthru
      _
    // Predicated region
    $region14: #{_decode_call.1} parent=1 // pred_check
      _
    $region15: #{_decode_call.1} parent=1 // pred_check_branch
      %24 = sbr.rel (0) target = $region17
    $region16: #{_decode_call.1} parent=1 // pred_region
      _
    $region17: #{_decode_call.1} parent=1 // pred_fallthru
      _
    // Predicated region
    $region18: #{_decode_call.1} parent=1 // pred_check
      _
    $region19: #{_decode_call.1} parent=1 // pred_check_branch
      %26 = sbr.rel (0) target = $region21
    $region20: #{_decode_call.1} parent=1 // pred_region
      _
    $region21: #{_decode_call.1} parent=1 // pred_fallthru
      _
    %p28 = scmp.eq.s32.totalorder 0, 0
    // Predicated region
    $region22: #{_decode_call.1} parent=1 // pred_check
      %p29 = pneg %p28
    $region23: #{_decode_call.1} parent=1 // pred_check_branch
      %31 = sbr.rel (%p29) target = $region25
    $region24: #{_decode_call.1} parent=1 // pred_region
      %v32 = vld [vmem:[%s2] sm:$0x1]
      %vm33 = vcmask 253952
      %34 = vst.msk [vmem:[#allocation2] sm:$0x1] %vm33, %v32
    $region25: #{_decode_call.1} parent=1 // pred_fallthru
      _
    %v35 = vlaneseq
    %v36 = vand.u32 %v35, 127
    %s37 = sld [smem:[#allocation4]]
    %v38 = vstv %s37
    %vm39 = vcmp.eq.s32.totalorder %v36, %v38
    %v40 = vsel %vm39, 1, 0
    %v41 = vcvt.s32.f32 %v40
    %v42 = vld [vmem:[%s1] sm:$0xff]
    %v43 = vld [vmem:[%s1 + $0x8] sm:$0xff]
    %v44 = vld [vmem:[%s1 + $0x10] sm:$0xff]
    %v45 = vld [vmem:[%s1 + $0x18] sm:$0xff]
    %v46 = vld [vmem:[%s1 + $0x20] sm:$0xff]
    %v47 = vld [vmem:[%s1 + $0x28] sm:$0xff]
    %v48 = vld [vmem:[%s1 + $0x30] sm:$0xff]
    %v49 = vld [vmem:[%s1 + $0x38] sm:$0xff]
    %vm50 = vcmask 523264
    %v52 = vsel %vm50, %v41, 0
    %54 = vmatprep.subr.mxu0 0.0
    %55 = vmatpush1.msra.mxu0 %v42
    %56 = vmatprep.subr.mxu0 0.0
    %57 = vmatpush1.msra.mxu0 %v43
    %58 = vmatprep.subr.mxu0 0.0
    %59 = vmatpush1.msra.mxu0 %v44
    %60 = vmatprep.subr.mxu0 0.0
    %61 = vmatpush1.msra.mxu0 %v45
    %62 = vmatprep.subr.mxu0 0.0
    %63 = vmatpush1.msra.mxu0 %v46
    %64 = vmatprep.subr.mxu0 0.0
    %65 = vmatpush1.msra.mxu0 %v47
    %66 = vmatprep.subr.mxu0 0.0
    %67 = vmatpush1.msra.mxu0 %v48
    %68 = vmatprep.subr.mxu0 0.0
    %69 = vmatpush1.msra.mxu0 %v49
    %70 = vmatprep.subr.mxu0 0.0
    %71 = vmatpush1.msra.mxu0 0.0
    %72 = vmatprep.subr.mxu0 0.0
    %73 = vmatpush1.msra.mxu0 0.0
    %74 = vmatprep.subr.mxu0 0.0
    %75 = vmatpush1.msra.mxu0 0.0
    %76 = vmatprep.subr.mxu0 0.0
    %77 = vmatpush1.msra.mxu0 0.0
    %78 = vmatprep.subr.mxu0 0.0
    %79 = vmatpush1.msra.mxu0 0.0
    %80 = vmatprep.subr.mxu0 0.0
    %81 = vmatpush1.msra.mxu0 0.0
    %82 = vmatprep.subr.mxu0 0.0
    %83 = vmatpush1.msra.mxu0 0.0
    %84 = vmatprep.subr.mxu0 0.0
    %85 = vmatpush1.msra.mxu0 0.0
    %86 = vmatprep.subr.mxu0 0.0
    %87 = vmatpush1.msra.mxu0 0.0
    %88 = vmatprep.subr.mxu0 0.0
    %89 = vmatpush1.msra.mxu0 0.0
    %90 = vmatprep.subr.mxu0 0.0
    %91 = vmatpush1.msra.mxu0 0.0
    %92 = vmatprep.subr.mxu0 0.0
    %93 = vmatpush1.msra.mxu0 0.0
    %94 = vmatprep.subr.mxu0 0.0
    %95 = vmatpush1.msra.mxu0 0.0
    %96 = vmatprep.subr.mxu0 0.0
    %97 = vmatpush1.msra.mxu0 0.0
    %98 = vmatprep.subr.mxu0 0.0
    %99 = vmatpush1.msra.mxu0 0.0
    %100 = vmatprep.subr.mxu0 0.0
    %101 = vmatpush1.msra.mxu0 0.0
    %102 = vmatprep.subr.mxu0 0.0
    %103 = vmatpush1.msra.mxu0 0.0
    %104 = vmatprep.subr.mxu0 0.0
    %105 = vmatpush1.msra.mxu0 0.0
    %106 = vmatprep.subr.mxu0 0.0
    %107 = vmatpush1.msra.mxu0 0.0
    %108 = vmatprep.subr.mxu0 0.0
    %109 = vmatpush1.msra.mxu0 0.0
    %110 = vmatprep.subr.mxu0 0.0
    %111 = vmatpush1.msra.mxu0 0.0
    %112 = vmatprep.subr.mxu0 0.0
    %113 = vmatpush1.msra.mxu0 0.0
    %114 = vmatprep.subr.mxu0 0.0
    %115 = vmatpush1.msra.mxu0 0.0
    %116 = vmatprep.subr.mxu0 0.0
    %117 = vmatpush1.msra.mxu0 0.0
    %118 = vmatprep.mubr.f32.mxu0 0.0
    %119 = vmatmul.mubr.f32.gmra.mrb[0].mxu0 %v52
    %v120 = vpop.f32.mrb[0].mxu0
    %v121 = vadd.f32 0.0, %v120
    %v122 = vpop.f32.mrb[0].mxu0
    %123 = vdwg.mxu0
    %v124 = vpack.c.bf16 %v121, %v121
    %v125 = vld [vmem:[#allocation2] sm:$0x1]
    %v126 = vpack.c.bf16 %v125, %v125
    %v127 = vld [vmem:[%s4] sm:$0xf]
    %v128 = vld [vmem:[%s4 + $0x4] sm:$0xf]
    %v129 = vld [vmem:[%s4 + $0x8] sm:$0xf]
    %v130 = vld [vmem:[%s4 + $0xc] sm:$0xf]
    %v131 = vld [vmem:[%s4 + $0x10] sm:$0xf]
    %v132 = vld [vmem:[%s4 + $0x14] sm:$0xf]
    %v133 = vld [vmem:[%s4 + $0x18] sm:$0xf]
    %v134 = vld [vmem:[%s4 + $0x1c] sm:$0xf]
    %v139 = vunpack.c.l.b16 %v131
    %v140 = vunpack.c.l.b16 %v132
    %v141 = vunpack.c.l.b16 %v133
    %v142 = vunpack.c.l.b16 %v134
    %v143 = vpack.c.b16 %v140, %v139
    %v144 = vpack.c.b16 %v142, %v141
    %vm147 = vcmask 261120
    %v149 = vsel %vm147, %v126, 0
    %151 = vmatprep.subr.bf16.mxu0 0
    %152 = vmatpush1.bf16.msra.mxu0 %v143
    %153 = vmatprep.subr.bf16.mxu0 0
    %154 = vmatpush1.bf16.msra.mxu0 %v144
    %155 = vmatprep.subr.bf16.mxu0 0
    %156 = vmatpush1.bf16.msra.mxu0 0
    %157 = vmatprep.subr.bf16.mxu0 0
    %158 = vmatpush1.bf16.msra.mxu0 0
    %159 = vmatprep.subr.bf16.mxu0 0
    %160 = vmatpush1.bf16.msra.mxu0 0
    %161 = vmatprep.subr.bf16.mxu0 0
    %162 = vmatpush1.bf16.msra.mxu0 0
    %163 = vmatprep.subr.bf16.mxu0 0
    %164 = vmatpush1.bf16.msra.mxu0 0
    %165 = vmatprep.subr.bf16.mxu0 0
    %166 = vmatpush1.bf16.msra.mxu0 0
    %167 = vmatprep.subr.bf16.mxu0 0
    %168 = vmatpush1.bf16.msra.mxu0 0
    %169 = vmatprep.subr.bf16.mxu0 0
    %170 = vmatpush1.bf16.msra.mxu0 0
    %171 = vmatprep.subr.bf16.mxu0 0
    %172 = vmatpush1.bf16.msra.mxu0 0
    %173 = vmatprep.subr.bf16.mxu0 0
    %174 = vmatpush1.bf16.msra.mxu0 0
    %175 = vmatprep.subr.bf16.mxu0 0
    %176 = vmatpush1.bf16.msra.mxu0 0
    %177 = vmatprep.subr.bf16.mxu0 0
    %178 = vmatpush1.bf16.msra.mxu0 0
    %179 = vmatprep.subr.bf16.mxu0 0
    %180 = vmatpush1.bf16.msra.mxu0 0
    %181 = vmatprep.subr.bf16.mxu0 0
    %182 = vmatpush1.bf16.msra.mxu0 0
    %183 = vmatprep.mubr.bf16.mxu0 0
    %184 = vmatmul.mubr.bf16.gmra.mrb[0].mxu0 %v149
    %v185 = vpop.f32.mrb[0].mxu0
    %v186 = vadd.f32 0.0, %v185
    %v187 = vpop.f32.mrb[0].mxu0
    %v188 = vpop.f32.mrb[0].mxu0
    %v189 = vpop.f32.mrb[0].mxu0
    %190 = vdwg.mxu0
    %v195 = vunpack.c.l.b16 %v127
    %v196 = vunpack.c.l.b16 %v128
    %v197 = vunpack.c.l.b16 %v129
    %v198 = vunpack.c.l.b16 %v130
    %v199 = vpack.c.b16 %v196, %v195
    %v200 = vpack.c.b16 %v198, %v197
    %v204 = vsel %vm147, %v124, 0
    %206 = vmatprep.subr.bf16.mxu0 0
    %207 = vmatpush1.bf16.msra.mxu0 %v199
    %208 = vmatprep.subr.bf16.mxu0 0
    %209 = vmatpush1.bf16.msra.mxu0 %v200
    %210 = vmatprep.subr.bf16.mxu0 0
    %211 = vmatpush1.bf16.msra.mxu0 0
    %212 = vmatprep.subr.bf16.mxu0 0
    %213 = vmatpush1.bf16.msra.mxu0 0
    %214 = vmatprep.subr.bf16.mxu0 0
    %215 = vmatpush1.bf16.msra.mxu0 0
    %216 = vmatprep.subr.bf16.mxu0 0
    %217 = vmatpush1.bf16.msra.mxu0 0
    %218 = vmatprep.subr.bf16.mxu0 0
    %219 = vmatpush1.bf16.msra.mxu0 0
    %220 = vmatprep.subr.bf16.mxu0 0
    %221 = vmatpush1.bf16.msra.mxu0 0
    %222 = vmatprep.subr.bf16.mxu0 0
    %223 = vmatpush1.bf16.msra.mxu0 0
    %224 = vmatprep.subr.bf16.mxu0 0
    %225 = vmatpush1.bf16.msra.mxu0 0
    %226 = vmatprep.subr.bf16.mxu0 0
    %227 = vmatpush1.bf16.msra.mxu0 0
    %228 = vmatprep.subr.bf16.mxu0 0
    %229 = vmatpush1.bf16.msra.mxu0 0
    %230 = vmatprep.subr.bf16.mxu0 0
    %231 = vmatpush1.bf16.msra.mxu0 0
    %232 = vmatprep.subr.bf16.mxu0 0
    %233 = vmatpush1.bf16.msra.mxu0 0
    %234 = vmatprep.subr.bf16.mxu0 0
    %235 = vmatpush1.bf16.msra.mxu0 0
    %236 = vmatprep.subr.bf16.mxu0 0
    %237 = vmatpush1.bf16.msra.mxu0 0
    %238 = vmatprep.mubr.bf16.mxu0 0
    %239 = vmatmul.mubr.bf16.gmra.mrb[0].mxu0 %v204
    %v240 = vpop.f32.mrb[0].mxu0
    %v241 = vadd.f32 %v186, %v240
    %v242 = vpop.f32.mrb[0].mxu0
    %v243 = vpop.f32.mrb[0].mxu0
    %v244 = vpop.f32.mrb[0].mxu0
    %245 = vdwg.mxu0
    %v246 = vld [vmem:[%s5] sm:$0x1]
    %v247 = vadd.f32 %v241, %v246
    %vm248 = vcmp.lt.s32.totalorder %v36, 20
    %v249 = vsel %vm248, %v247, -inf
    %vm250 = vcmask 1040384
    %v251 = vsel %vm250, %v249, -inf
    %252 = vmax.xlane.f32.xlu0 %v251
    %v253 = vpop.xlane.xlu0 %252
    %v254 = vsub.f32 %v249, %v253
    %v255 = vmul.f32 %v254, 1.442695
    %v256 = vpow.pop %v255
    %v257 = vsel %vm250, %v256, 0.0
    %258 = vadd.xlane.f32.xlu0 %v257
    %v259 = vpop.xlane.xlu0 %258
    %v260 = vrcp.pop %v259
    %v261 = vmul.f32 %v256, %v260
    %v262 = vld [vmem:[%s3] sm:$0xff]
    %v263 = vld [vmem:[%s3 + $0x8] sm:$0xff]
    %v264 = vld [vmem:[%s3 + $0x10] sm:$0xff]
    %v265 = vld [vmem:[%s3 + $0x18] sm:$0xff]
    %v266 = vld [vmem:[%s3 + $0x20] sm:$0xff]
    %v267 = vld [vmem:[%s3 + $0x28] sm:$0xff]
    %v268 = vld [vmem:[%s3 + $0x30] sm:$0xff]
    %v269 = vld [vmem:[%s3 + $0x38] sm:$0xff]
    %v270 = vld [vmem:[%s3 + $0x40] sm:$0xff]
    %v271 = vld [vmem:[%s3 + $0x48] sm:$0xff]
    %v272 = vld [vmem:[%s3 + $0x50] sm:$0xff]
    %v273 = vld [vmem:[%s3 + $0x58] sm:$0xff]
    %v274 = vld [vmem:[%s3 + $0x60] sm:$0xff]
    %v275 = vld [vmem:[%s3 + $0x68] sm:$0xff]
    %v276 = vld [vmem:[%s3 + $0x70] sm:$0xff]
    %v277 = vld [vmem:[%s3 + $0x78] sm:$0xff]
    %278 = vmatprep.subr.mxu0 0.0
    %279 = vmatpush1.msra.mxu0 %v262
    %280 = vmatprep.subr.mxu0 0.0
    %281 = vmatpush1.msra.mxu0 %v263
    %282 = vmatprep.subr.mxu0 0.0
    %283 = vmatpush1.msra.mxu0 %v264
    %284 = vmatprep.subr.mxu0 0.0
    %285 = vmatpush1.msra.mxu0 %v265
    %286 = vmatprep.subr.mxu0 0.0
    %287 = vmatpush1.msra.mxu0 %v266
    %288 = vmatprep.subr.mxu0 0.0
    %289 = vmatpush1.msra.mxu0 %v267
    %290 = vmatprep.subr.mxu0 0.0
    %291 = vmatpush1.msra.mxu0 %v268
    %292 = vmatprep.subr.mxu0 0.0
    %293 = vmatpush1.msra.mxu0 %v269
    %294 = vmatprep.subr.mxu0 0.0
    %295 = vmatpush1.msra.mxu0 %v270
    %296 = vmatprep.subr.mxu0 0.0
    %297 = vmatpush1.msra.mxu0 %v271
    %298 = vmatprep.subr.mxu0 0.0
    %299 = vmatpush1.msra.mxu0 %v272
    %300 = vmatprep.subr.mxu0 0.0
    %301 = vmatpush1.msra.mxu0 %v273
    %302 = vmatprep.subr.mxu0 0.0
    %303 = vmatpush1.msra.mxu0 %v274
    %304 = vmatprep.subr.mxu0 0.0
    %305 = vmatpush1.msra.mxu0 %v275
    %306 = vmatprep.subr.mxu0 0.0
    %307 = vmatpush1.msra.mxu0 %v276
    %308 = vmatprep.subr.mxu0 0.0
    %309 = vmatpush1.msra.mxu0 %v277
    %310 = vmatprep.subr.mxu0 0.0
    %311 = vmatpush1.msra.mxu0 0.0
    %312 = vmatprep.subr.mxu0 0.0
    %313 = vmatpush1.msra.mxu0 0.0
    %314 = vmatprep.subr.mxu0 0.0
    %315 = vmatpush1.msra.mxu0 0.0
    %316 = vmatprep.subr.mxu0 0.0
    %317 = vmatpush1.msra.mxu0 0.0
    %318 = vmatprep.subr.mxu0 0.0
    %319 = vmatpush1.msra.mxu0 0.0
    %320 = vmatprep.subr.mxu0 0.0
    %321 = vmatpush1.msra.mxu0 0.0
    %322 = vmatprep.subr.mxu0 0.0
    %323 = vmatpush1.msra.mxu0 0.0
    %324 = vmatprep.subr.mxu0 0.0
    %325 = vmatpush1.msra.mxu0 0.0
    %326 = vmatprep.subr.mxu0 0.0
    %327 = vmatpush1.msra.mxu0 0.0
    %328 = vmatprep.subr.mxu0 0.0
    %329 = vmatpush1.msra.mxu0 0.0
    %330 = vmatprep.subr.mxu0 0.0
    %331 = vmatpush1.msra.mxu0 0.0
    %332 = vmatprep.subr.mxu0 0.0
    %333 = vmatpush1.msra.mxu0 0.0
    %334 = vmatprep.subr.mxu0 0.0
    %335 = vmatpush1.msra.mxu0 0.0
    %336 = vmatprep.subr.mxu0 0.0
    %337 = vmatpush1.msra.mxu0 0.0
    %338 = vmatprep.subr.mxu0 0.0
    %339 = vmatpush1.msra.mxu0 0.0
    %340 = vmatprep.subr.mxu0 0.0
    %341 = vmatpush1.msra.mxu0 0.0
    %342 = vmatprep.mubr.f32.mxu0 0.0
    %343 = vmatmul.mubr.f32.gmra.mrb[0].mxu0 %v261
    %v344 = vpop.f32.mrb[0].mxu0
    %v345 = vadd.f32 0.0, %v344
    %v346 = vpop.f32.mrb[0].mxu0
    %347 = vdwg.mxu0
    %v348 = vld [vmem:[%s4 + $0x20] sm:$0xf]
    %v349 = vld [vmem:[%s4 + $0x24] sm:$0xf]
    %v350 = vld [vmem:[%s4 + $0x28] sm:$0xf]
    %v351 = vld [vmem:[%s4 + $0x2c] sm:$0xf]
    %v352 = vpack.c.bf16 %v345, %v345
    %v353 = vld [vmem:[%s4 + $0x30] sm:$0xf]
    %v354 = vld [vmem:[%s4 + $0x34] sm:$0xf]
    %v355 = vld [vmem:[%s4 + $0x38] sm:$0xf]
    %v356 = vld [vmem:[%s4 + $0x3c] sm:$0xf]
    %v361 = vunpack.c.l.b16 %v353
    %v362 = vunpack.c.l.b16 %v354
    %v363 = vunpack.c.l.b16 %v355
    %v364 = vunpack.c.l.b16 %v356
    %v365 = vpack.c.b16 %v362, %v361
    %v366 = vpack.c.b16 %v364, %v363
    %v370 = vsel %vm147, %v352, 0
    %372 = vmatprep.subr.bf16.mxu0 0
    %373 = vmatpush1.bf16.msra.mxu0 %v365
    %374 = vmatprep.subr.bf16.mxu0 0
    %375 = vmatpush1.bf16.msra.mxu0 %v366
    %376 = vmatprep.subr.bf16.mxu0 0
    %377 = vmatpush1.bf16.msra.mxu0 0
    %378 = vmatprep.subr.bf16.mxu0 0
    %379 = vmatpush1.bf16.msra.mxu0 0
    %380 = vmatprep.subr.bf16.mxu0 0
    %381 = vmatpush1.bf16.msra.mxu0 0
    %382 = vmatprep.subr.bf16.mxu0 0
    %383 = vmatpush1.bf16.msra.mxu0 0
    %384 = vmatprep.subr.bf16.mxu0 0
    %385 = vmatpush1.bf16.msra.mxu0 0
    %386 = vmatprep.subr.bf16.mxu0 0
    %387 = vmatpush1.bf16.msra.mxu0 0
    %388 = vmatprep.subr.bf16.mxu0 0
    %389 = vmatpush1.bf16.msra.mxu0 0
    %390 = vmatprep.subr.bf16.mxu0 0
    %391 = vmatpush1.bf16.msra.mxu0 0
    %392 = vmatprep.subr.bf16.mxu0 0
    %393 = vmatpush1.bf16.msra.mxu0 0
    %394 = vmatprep.subr.bf16.mxu0 0
    %395 = vmatpush1.bf16.msra.mxu0 0
    %396 = vmatprep.subr.bf16.mxu0 0
    %397 = vmatpush1.bf16.msra.mxu0 0
    %398 = vmatprep.subr.bf16.mxu0 0
    %399 = vmatpush1.bf16.msra.mxu0 0
    %400 = vmatprep.subr.bf16.mxu0 0
    %401 = vmatpush1.bf16.msra.mxu0 0
    %402 = vmatprep.subr.bf16.mxu0 0
    %403 = vmatpush1.bf16.msra.mxu0 0
    %404 = vmatprep.mubr.bf16.mxu0 0
    %405 = vmatmul.mubr.bf16.gmra.mrb[0].mxu0 %v370
    %v406 = vpop.f32.mrb[0].mxu0
    %v407 = vadd.f32 0.0, %v406
    %v408 = vpop.f32.mrb[0].mxu0
    %v409 = vpop.f32.mrb[0].mxu0
    %v410 = vpop.f32.mrb[0].mxu0
    %411 = vdwg.mxu0
    %v416 = vunpack.c.l.b16 %v348
    %v417 = vunpack.c.l.b16 %v349
    %v418 = vunpack.c.l.b16 %v350
    %v419 = vunpack.c.l.b16 %v351
    %v420 = vpack.c.b16 %v417, %v416
    %v421 = vpack.c.b16 %v419, %v418
    %424 = vmatprep.subr.bf16.mxu0 0
    %425 = vmatpush1.bf16.msra.mxu0 %v420
    %426 = vmatprep.subr.bf16.mxu0 0
    %427 = vmatpush1.bf16.msra.mxu0 %v421
    %428 = vmatprep.subr.bf16.mxu0 0
    %429 = vmatpush1.bf16.msra.mxu0 0
    %430 = vmatprep.subr.bf16.mxu0 0
    %431 = vmatpush1.bf16.msra.mxu0 0
    %432 = vmatprep.subr.bf16.mxu0 0
    %433 = vmatpush1.bf16.msra.mxu0 0
    %434 = vmatprep.subr.bf16.mxu0 0
    %435 = vmatpush1.bf16.msra.mxu0 0
    %436 = vmatprep.subr.bf16.mxu0 0
    %437 = vmatpush1.bf16.msra.mxu0 0
    %438 = vmatprep.subr.bf16.mxu0 0
    %439 = vmatpush1.bf16.msra.mxu0 0
    %440 = vmatprep.subr.bf16.mxu0 0
    %441 = vmatpush1.bf16.msra.mxu0 0
    %442 = vmatprep.subr.bf16.mxu0 0
    %443 = vmatpush1.bf16.msra.mxu0 0
    %444 = vmatprep.subr.bf16.mxu0 0
    %445 = vmatpush1.bf16.msra.mxu0 0
    %446 = vmatprep.subr.bf16.mxu0 0
    %447 = vmatpush1.bf16.msra.mxu0 0
    %448 = vmatprep.subr.bf16.mxu0 0
    %449 = vmatpush1.bf16.msra.mxu0 0
    %450 = vmatprep.subr.bf16.mxu0 0
    %451 = vmatpush1.bf16.msra.mxu0 0
    %452 = vmatprep.subr.bf16.mxu0 0
    %453 = vmatpush1.bf16.msra.mxu0 0
    %454 = vmatprep.subr.bf16.mxu0 0
    %455 = vmatpush1.bf16.msra.mxu0 0
    %456 = vmatprep.mubr.bf16.mxu0 0
    %457 = vmatmul.mubr.bf16.gmra.mrb[0].mxu0 %v204
    %v458 = vpop.f32.mrb[0].mxu0
    %v459 = vadd.f32 %v407, %v458
    %v460 = vpop.f32.mrb[0].mxu0
    %v461 = vpop.f32.mrb[0].mxu0
    %v462 = vpop.f32.mrb[0].mxu0
    %463 = vdwg.mxu0
    %v464 = vld [vmem:[%s5 + $0x1] sm:$0x1]
    %v465 = vadd.f32 %v459, %v464
    %v466 = vmax.f32 %v465, 0.0
    %v467 = vpack.c.bf16 %v466, %v466
    %v468 = vld [vmem:[%s4 + $0x40] sm:$0xf]
    %v469 = vld [vmem:[%s4 + $0x44] sm:$0xf]
    %v470 = vld [vmem:[%s4 + $0x48] sm:$0xf]
    %v471 = vld [vmem:[%s4 + $0x4c] sm:$0xf]
    %v472 = vld [vmem:[%s5 + $0x2] sm:$0x1]
    %v477 = vunpack.c.l.b16 %v468
    %v478 = vunpack.c.l.b16 %v469
    %v479 = vunpack.c.l.b16 %v470
    %v480 = vunpack.c.l.b16 %v471
    %v481 = vpack.c.b16 %v478, %v477
    %v482 = vpack.c.b16 %v480, %v479
    %v486 = vsel %vm147, %v467, 0
    %488 = vmatprep.subr.bf16.mxu0 0
    %489 = vmatpush1.bf16.msra.mxu0 %v481
    %490 = vmatprep.subr.bf16.mxu0 0
    %491 = vmatpush1.bf16.msra.mxu0 %v482
    %492 = vmatprep.subr.bf16.mxu0 0
    %493 = vmatpush1.bf16.msra.mxu0 0
    %494 = vmatprep.subr.bf16.mxu0 0
    %495 = vmatpush1.bf16.msra.mxu0 0
    %496 = vmatprep.subr.bf16.mxu0 0
    %497 = vmatpush1.bf16.msra.mxu0 0
    %498 = vmatprep.subr.bf16.mxu0 0
    %499 = vmatpush1.bf16.msra.mxu0 0
    %500 = vmatprep.subr.bf16.mxu0 0
    %501 = vmatpush1.bf16.msra.mxu0 0
    %502 = vmatprep.subr.bf16.mxu0 0
    %503 = vmatpush1.bf16.msra.mxu0 0
    %504 = vmatprep.subr.bf16.mxu0 0
    %505 = vmatpush1.bf16.msra.mxu0 0
    %506 = vmatprep.subr.bf16.mxu0 0
    %507 = vmatpush1.bf16.msra.mxu0 0
    %508 = vmatprep.subr.bf16.mxu0 0
    %509 = vmatpush1.bf16.msra.mxu0 0
    %510 = vmatprep.subr.bf16.mxu0 0
    %511 = vmatpush1.bf16.msra.mxu0 0
    %512 = vmatprep.subr.bf16.mxu0 0
    %513 = vmatpush1.bf16.msra.mxu0 0
    %514 = vmatprep.subr.bf16.mxu0 0
    %515 = vmatpush1.bf16.msra.mxu0 0
    %516 = vmatprep.subr.bf16.mxu0 0
    %517 = vmatpush1.bf16.msra.mxu0 0
    %518 = vmatprep.subr.bf16.mxu0 0
    %519 = vmatpush1.bf16.msra.mxu0 0
    %520 = vmatprep.mubr.bf16.mxu0 0
    %521 = vmatmul.mubr.bf16.gmra.mrb[0].mxu0 %v486
    %v522 = vpop.f32.mrb[0].mxu0
    %v523 = vadd.f32 %v472, %v522
    %v524 = vpop.f32.mrb[0].mxu0
    %v525 = vpop.f32.mrb[0].mxu0
    %v526 = vpop.f32.mrb[0].mxu0
    %527 = vdwg.mxu0
    %v528 = vld [vmem:[%s4 + $0x50] sm:$0xf]
    %v529 = vld [vmem:[%s4 + $0x54] sm:$0xf]
    %v530 = vld [vmem:[%s4 + $0x58] sm:$0xf]
    %v531 = vld [vmem:[%s4 + $0x5c] sm:$0xf]
    %v532 = vld [vmem:[%s5 + $0x3] sm:$0x1]
    %v537 = vunpack.c.l.b16 %v528
    %v538 = vunpack.c.l.b16 %v529
    %v539 = vunpack.c.l.b16 %v530
    %v540 = vunpack.c.l.b16 %v531
    %v541 = vpack.c.b16 %v538, %v537
    %v542 = vpack.c.b16 %v540, %v539
    %545 = vmatprep.subr.bf16.mxu0 0
    %546 = vmatpush1.bf16.msra.mxu0 %v541
    %547 = vmatprep.subr.bf16.mxu0 0
    %548 = vmatpush1.bf16.msra.mxu0 %v542
    %549 = vmatprep.subr.bf16.mxu0 0
    %550 = vmatpush1.bf16.msra.mxu0 0
    %551 = vmatprep.subr.bf16.mxu0 0
    %552 = vmatpush1.bf16.msra.mxu0 0
    %553 = vmatprep.subr.bf16.mxu0 0
    %554 = vmatpush1.bf16.msra.mxu0 0
    %555 = vmatprep.subr.bf16.mxu0 0
    %556 = vmatpush1.bf16.msra.mxu0 0
    %557 = vmatprep.subr.bf16.mxu0 0
    %558 = vmatpush1.bf16.msra.mxu0 0
    %559 = vmatprep.subr.bf16.mxu0 0
    %560 = vmatpush1.bf16.msra.mxu0 0
    %561 = vmatprep.subr.bf16.mxu0 0
    %562 = vmatpush1.bf16.msra.mxu0 0
    %563 = vmatprep.subr.bf16.mxu0 0
    %564 = vmatpush1.bf16.msra.mxu0 0
    %565 = vmatprep.subr.bf16.mxu0 0
    %566 = vmatpush1.bf16.msra.mxu0 0
    %567 = vmatprep.subr.bf16.mxu0 0
    %568 = vmatpush1.bf16.msra.mxu0 0
    %569 = vmatprep.subr.bf16.mxu0 0
    %570 = vmatpush1.bf16.msra.mxu0 0
    %571 = vmatprep.subr.bf16.mxu0 0
    %572 = vmatpush1.bf16.msra.mxu0 0
    %573 = vmatprep.subr.bf16.mxu0 0
    %574 = vmatpush1.bf16.msra.mxu0 0
    %575 = vmatprep.subr.bf16.mxu0 0
    %576 = vmatpush1.bf16.msra.mxu0 0
    %577 = vmatprep.mubr.bf16.mxu0 0
    %578 = vmatmul.mubr.bf16.gmra.mrb[0].mxu0 %v149
    %v579 = vpop.f32.mrb[0].mxu0
    %v580 = vadd.f32 %v532, %v579
    %v581 = vpop.f32.mrb[0].mxu0
    %v582 = vpop.f32.mrb[0].mxu0
    %v583 = vpop.f32.mrb[0].mxu0
    %584 = vdwg.mxu0
    %v585 = vadd.f32 %v523, %v580
    %v586 = vxor.u32 %v585, 2147483648
    %v587 = vmul.f32 %v586, 1.442695
    %v588 = vpow.pop %v587
    %v589 = vadd.f32 %v588, 1.0
    %v590 = vrcp.pop %v589
    %v591 = vmul.f32 1.0, %v590
    %593 = vrot.lane.b32.xlu0 %v580, 64
    %v594 = vpop.permute.xlu0 %593
    %v596 = vmul.f32 %v591, %v594
    %598 = vrot.lane.b32.xlu0 %v596, 64
    %v599 = vpop.permute.xlu0 %598
    %v601 = vadd.f32 %v523, %v599
    %v602 = vtanh.pop %v601
    %v603 = vsub.f32 1.0, %v591
    %605 = vrot.lane.b32.xlu0 %v602, 96
    %v606 = vpop.permute.xlu0 %605
    %v608 = vmul.f32 %v603, %v606
    %v610 = vlaneseq
    %v611 = vshrl.u32 %v610, 7
    %v612 = vsub.s32 0, %v611
    %v613 = vrot.slane %v125, %v612
    %614 = vrot.lane.b32.xlu0 %v613, 32
    %v615 = vpop.permute.xlu0 %614
    %v617 = vmul.f32 %v591, %v615
    %v618 = vadd.f32 %v608, %v617
    %v619 = vpack.c.bf16 %v618, %v618
    %v620 = vld [vmem:[%s4 + $0x60] sm:$0xf]
    %v621 = vld [vmem:[%s4 + $0x64] sm:$0xf]
    %v622 = vld [vmem:[%s4 + $0x68] sm:$0xf]
    %v623 = vld [vmem:[%s4 + $0x6c] sm:$0xf]
    %v624 = vld [vmem:[%s5 + $0x4] sm:$0x1]
    %626 = vrot.lane.b32.xlu0 %v619, 96
    %v627 = vpop.permute.xlu0 %626
    %v632 = vunpack.c.l.b16 %v620
    %v633 = vunpack.c.l.b16 %v621
    %v634 = vunpack.c.l.b16 %v622
    %v635 = vunpack.c.l.b16 %v623
    %v636 = vpack.c.b16 %v633, %v632
    %v637 = vpack.c.b16 %v635, %v634
    %v641 = vsel %vm147, %v627, 0
    %643 = vmatprep.subr.bf16.mxu0 0
    %644 = vmatpush1.bf16.msra.mxu0 %v636
    %645 = vmatprep.subr.bf16.mxu0 0
    %646 = vmatpush1.bf16.msra.mxu0 %v637
    %647 = vmatprep.subr.bf16.mxu0 0
    %648 = vmatpush1.bf16.msra.mxu0 0
    %649 = vmatprep.subr.bf16.mxu0 0
    %650 = vmatpush1.bf16.msra.mxu0 0
    %651 = vmatprep.subr.bf16.mxu0 0
    %652 = vmatpush1.bf16.msra.mxu0 0
    %653 = vmatprep.subr.bf16.mxu0 0
    %654 = vmatpush1.bf16.msra.mxu0 0
    %655 = vmatprep.subr.bf16.mxu0 0
    %656 = vmatpush1.bf16.msra.mxu0 0
    %657 = vmatprep.subr.bf16.mxu0 0
    %658 = vmatpush1.bf16.msra.mxu0 0
    %659 = vmatprep.subr.bf16.mxu0 0
    %660 = vmatpush1.bf16.msra.mxu0 0
    %661 = vmatprep.subr.bf16.mxu0 0
    %662 = vmatpush1.bf16.msra.mxu0 0
    %663 = vmatprep.subr.bf16.mxu0 0
    %664 = vmatpush1.bf16.msra.mxu0 0
    %665 = vmatprep.subr.bf16.mxu0 0
    %666 = vmatpush1.bf16.msra.mxu0 0
    %667 = vmatprep.subr.bf16.mxu0 0
    %668 = vmatpush1.bf16.msra.mxu0 0
    %669 = vmatprep.subr.bf16.mxu0 0
    %670 = vmatpush1.bf16.msra.mxu0 0
    %671 = vmatprep.subr.bf16.mxu0 0
    %672 = vmatpush1.bf16.msra.mxu0 0
    %673 = vmatprep.subr.bf16.mxu0 0
    %674 = vmatpush1.bf16.msra.mxu0 0
    %675 = vmatprep.mubr.bf16.mxu0 0
    %676 = vmatmul.mubr.bf16.gmra.mrb[0].mxu0 %v641
    %v677 = vpop.f32.mrb[0].mxu0
    %v678 = vadd.f32 %v624, %v677
    %v679 = vpop.f32.mrb[0].mxu0
    %v680 = vpop.f32.mrb[0].mxu0
    %v681 = vpop.f32.mrb[0].mxu0
    %682 = vdwg.mxu0
    %vm683 = vcmp.lt.s32.totalorder %v36, 64
    %v684 = vsel %vm683, %v678, -inf
    %v685 = vsel %vm250, %v684, -inf
    %686 = vmax.xlane.f32.xlu0 %v685
    %v687 = vpop.xlane.xlu0 %686
    %v688 = vsub.f32 %v684, %v687
    %v689 = vmul.f32 %v688, 1.442695
    %v690 = vpow.pop %v689
    %v691 = vsel %vm250, %v690, 0.0
    %692 = vadd.xlane.f32.xlu0 %v691
    %v693 = vpop.xlane.xlu0 %692
    %v694 = vlog2.pop %v693
    %v695 = vmul.f32 %v694, 0.6931472
    %v696 = vadd.f32 %v695, %v687
    %v697 = vsub.f32 %v678, %v696
    %v698 = vsel %vm683, %v697, 0.0
    %700 = vrot.lane.b32.xlu0 %v618, 96
    %v701 = vpop.permute.xlu0 %700
    %vm703 = vcmask 253952
    %704 = vst.msk [vmem:[#allocation2] sm:$0x1] %vm703, %v701
    %705 = vst [vmem:[#allocation5] sm:$0x1] %v698
    %706 = vst.msk [vmem:[#allocation7] sm:$0x1] %vm703, %v701
    %707 = vst [vmem:[#allocation9] sm:$0x1] %v261
    // Predicated region
    $region26: #{_decode_call.1} parent=1 // pred_check
      _
    $region27: #{_decode_call.1} parent=1 // pred_check_branch
      %709 = sbr.rel (0) target = $region29
    $region28: #{_decode_call.1} parent=1 // pred_region
      %s711 = ssub.s32 16, 16
      %712 = vsyncadd [#allocation6], %s711
      %s714 = sshll.u32 [#allocation5], 4
      %s715 = int_to_ptr.vmem [resolvable:$true] %s714
      %717 = dma.vmem_to_hbm [thread:$0]  %s715, 16, %s6, [#allocation6]
    $region29: #{_decode_call.1} parent=1 // pred_fallthru
      _
    // Predicated region
    $region30: #{_decode_call.1} parent=1 // pred_check
      _
    $region31: #{_decode_call.1} parent=1 // pred_check_branch
      %719 = sbr.rel (0) target = $region33
    $region32: #{_decode_call.1} parent=1 // pred_region
      %s721 = ssub.s32 16, 16
      %722 = vsyncadd [#allocation8], %s721
      %s724 = sshll.u32 [#allocation7], 4
      %s725 = int_to_ptr.vmem [resolvable:$true] %s724
      %727 = dma.vmem_to_hbm [thread:$0]  %s725, 16, %s7, [#allocation8]
    $region33: #{_decode_call.1} parent=1 // pred_fallthru
      _
    // Predicated region
    $region34: #{_decode_call.1} parent=1 // pred_check
      _
    $region35: #{_decode_call.1} parent=1 // pred_check_branch
      %729 = sbr.rel (0) target = $region37
    $region36: #{_decode_call.1} parent=1 // pred_region
      %s731 = ssub.s32 16, 16
      %732 = vsyncadd [#allocation8], %s731
      %s734 = sshll.u32 [#allocation9], 4
      %s735 = int_to_ptr.vmem [resolvable:$true] %s734
      %737 = dma.vmem_to_hbm [thread:$0]  %s735, 16, %s8, [#allocation8]
    $region37: #{_decode_call.1} parent=1 // pred_fallthru
      _
    // Predicated region
    $region38: #{_decode_call.1} parent=1 // pred_check
      _
    $region39: #{_decode_call.1} parent=1 // pred_check_branch
      %739 = sbr.rel (0) target = $region41
    $region40: #{_decode_call.1} parent=1 // pred_region
      %740 = dma.done [#allocation6], 16
    $region41: #{_decode_call.1} parent=1 // pred_fallthru
      _
    // Predicated region
    $region42: #{_decode_call.1} parent=1 // pred_check
      _
    $region43: #{_decode_call.1} parent=1 // pred_check_branch
      %742 = sbr.rel (0) target = $region45
    $region44: #{_decode_call.1} parent=1 // pred_region
      %743 = dma.done [#allocation8], 16
    $region45: #{_decode_call.1} parent=1 // pred_fallthru
      _
    // Predicated region
    $region46: #{_decode_call.1} parent=1 // pred_check
      _
    $region47: #{_decode_call.1} parent=1 // pred_check_branch
      %745 = sbr.rel (0) target = $region49
    $region48: #{_decode_call.1} parent=1 // pred_region
      %746 = dma.done [#allocation8], 16
    $region49: #{_decode_call.1} parent=1 // pred_fallthru
      _
    %747 = vsyncpa [#allocation6], 1
    %748 = vsyncpa [#allocation8], 1

</llo_original>
